<compile_context>
chip_gen: v7x
topology: tpu7x:2x2x1
jax: 0.10.0
libtpu: 0.0.40
codegen_flags: <defaults>
</compile_context>

<pallas_src>
import functools

import jax
import jax.numpy as jnp
import numpy as np
from jax.experimental import pallas as pl
from jax.experimental.pallas import tpu as pltpu

NUM_EMBEDDINGS = 50  # nn.Embedding(50, num_pos_feats)

# Output at or below this size is emitted in a single grid step (per-step
# overhead ~0.35 us dominates tiny problems); larger outputs tile over batch.
_SINGLE_STEP_BYTES = 4 * 1024 * 1024


def _pos_embed_kernel(col_t_ref, row_t_ref, sel_x_ref, sel_y_ref, out_ref, *,
                      F, precision):
    """col_t_ref: (F, W) = col_embed.weight[:W].T
    row_t_ref: (F, H) = row_embed.weight[:H].T
    sel_x_ref: (W, H*W) one-hot selector, sel_x[w, h*W + w] = 1
    sel_y_ref: (H, H*W) one-hot selector, sel_y[h, h*W + w] = 1
    out_ref:   (NB, 2F, H*W) channel-first position-embedding block."""
    # MXU performs the H-/W-replication; every product is exactly x*1 or x*0,
    # so the result is bit-exact (f32 path keeps Precision.HIGHEST).
    px = jnp.dot(col_t_ref[...], sel_x_ref[...],
                 preferred_element_type=jnp.float32, precision=precision)
    py = jnp.dot(row_t_ref[...], sel_y_ref[...],
                 preferred_element_type=jnp.float32, precision=precision)
    px = px.astype(out_ref.dtype)
    py = py.astype(out_ref.dtype)

    # Two direct lane-dense half-stores per batch row (no concat temporary).
    for b in range(out_ref.shape[0]):  # static; == 1 in the batched-grid path
        out_ref[b, :F, :] = px
        out_ref[b, F:, :] = py


def position_embedding_learned(x, col_weight, row_weight):
    """x: (B, C, H, W) NCHW (only the shape is used, as in the PyTorch module).
    col_weight / row_weight: (50, F).  Returns pos: (B, 2F, H, W)."""
    B, _, H, W = x.shape
    if H > NUM_EMBEDDINGS or W > NUM_EMBEDDINGS:
        raise ValueError(
            f"H={H}, W={W} must be <= {NUM_EMBEDDINGS} (embedding table size).")
    if col_weight.dtype != row_weight.dtype:
        raise ValueError("col_embed / row_embed weights must share a dtype.")
    F = col_weight.shape[1]
    L = H * W
    dtype = col_weight.dtype
    itemsize = np.dtype(dtype).itemsize

    # Embedding "lookup" with arange indices == static leading-row slice of the
    # tables; tiny one-time transpose so kernel operands are already (F, W)/(F, H).
    col_t = col_weight[:W].T   # (F, W)
    row_t = row_weight[:H].T   # (F, H)

    # One-hot replication selectors built once at trace time (numpy constants):
    #   px[f, h*W + w] = col[w, f]   py[f, h*W + w] = row[h, f]
    lanes = np.arange(L, dtype=np.int64)
    sel_x_np = (lanes[None, :] % W == np.arange(W)[:, None]).astype(np.dtype(dtype))
    sel_y_np = (lanes[None, :] // W == np.arange(H)[:, None]).astype(np.dtype(dtype))
    sel_x = jnp.asarray(sel_x_np)   # (W, L)
    sel_y = jnp.asarray(sel_y_np)   # (H, L)

    # f32 weights need HIGHEST so the one-hot matmul stays bit-exact; bf16
    # weights are already exact in a single DEFAULT-precision MXU pass.
    precision = (jax.lax.Precision.HIGHEST if np.dtype(dtype) == np.dtype(np.float32)
                 else jax.lax.Precision.DEFAULT)

    out_bytes = B * 2 * F * L * itemsize
    if out_bytes <= _SINGLE_STEP_BYTES:
        # Tiny output: one grid step, slab computed exactly once, all B copies
        # written from register.
        grid = (1,)
        out_block = (B, 2 * F, L)
        out_index = lambda i: (0, 0, 0)
    else:
        # Large output: one (1, 2F, L) block per batch element; B stays an
        # independent "parallel" axis (v7x shards it across both TensorCores).
        grid = (B,)
        out_block = (1, 2 * F, L)
        out_index = lambda b: (b, 0, 0)

    # Scoped-VMEM budget: double-buffered output block + constant inputs +
    # f32 matmul results + ~1 MiB slack (matters on v5e's 16 MiB default).
    out_block_bytes = int(np.prod(out_block)) * itemsize
    in_bytes = (F * (H + W) + (H + W) * L) * itemsize
    need = 2 * out_block_bytes + 2 * in_bytes + 2 * F * L * 4 + (1 << 20)
    vmem_limit = int(min(max(need, 16 * 1024 * 1024), 64 * 1024 * 1024))

    kernel = functools.partial(_pos_embed_kernel, F=F, precision=precision)
    pos_flat = pl.pallas_call(
        kernel,
        out_shape=jax.ShapeDtypeStruct((B, 2 * F, L), dtype),
        grid=grid,
        in_specs=[
            pl.BlockSpec((F, W), lambda i: (0, 0)),
            pl.BlockSpec((F, H), lambda i: (0, 0)),
            pl.BlockSpec((W, L), lambda i: (0, 0)),
            pl.BlockSpec((H, L), lambda i: (0, 0)),
        ],
        out_specs=pl.BlockSpec(out_block, out_index),
        compiler_params=pltpu.CompilerParams(
            dimension_semantics=("parallel",),
            vmem_limit_bytes=vmem_limit),
    )(col_t, row_t, sel_x, sel_y)

    # Trailing-dim reshape is layout-preserving (no extra HBM pass).
    return pos_flat.reshape(B, 2 * F, H, W)


def _reference(x, col_weight, row_weight):
    """Pure-JAX reference mirroring the PyTorch forward."""
    B, _, H, W = x.shape
    x_emb = col_weight[:W]                       # (W, F)
    y_emb = row_weight[:H]                       # (H, F)
    pos = jnp.concatenate(
        [
            jnp.broadcast_to(x_emb[None, :, :], (H, W, x_emb.shape[-1])),
            jnp.broadcast_to(y_emb[:, None, :], (H, W, y_emb.shape[-1])),
        ],
        axis=-1,
    )
    pos = jnp.transpose(pos, (2, 0, 1))[None]
    return jnp.broadcast_to(pos, (B,) + pos.shape[1:])


if __name__ == "__main__":
    key = jax.random.PRNGKey(0)
    k_x, k_row, k_col = jax.random.split(key, 3)

    B, C, H, W = 2, 4, 16, 16
    num_pos_feats = 32  # small, consistent with the module's shape family

    # Deterministic "uniform_" init of the embedding tables (as in reset_parameters).
    row_weight = jax.random.uniform(k_row, (NUM_EMBEDDINGS, num_pos_feats), jnp.float32)
    col_weight = jax.random.uniform(k_col, (NUM_EMBEDDINGS, num_pos_feats), jnp.float32)

    x = jax.random.normal(k_x, (B, C, H, W), jnp.float32)

    pos = jax.jit(position_embedding_learned)(x, col_weight, row_weight)
    pos = jax.block_until_ready(pos)

    ref = _reference(x, col_weight, row_weight)
    assert pos.shape == (B, 2 * num_pos_feats, H, W), pos.shape
    np.testing.assert_allclose(np.asarray(pos), np.asarray(ref), rtol=1e-6, atol=1e-6)

    print("KERNEL_OK")
</pallas_src>

<mosaic_0001>
module attributes {stable_mosaic.version = 11 : i64} {
  func.func @_pos_embed_kernel(%arg0: i32, %arg1: memref<32x16xf32, #tpu.memory_space<vmem>>, %arg2: memref<32x16xf32, #tpu.memory_space<vmem>>, %arg3: memref<16x256xf32, #tpu.memory_space<vmem>>, %arg4: memref<16x256xf32, #tpu.memory_space<vmem>>, %arg5: memref<2x64x256xf32, #tpu.memory_space<vmem>>) attributes {dimension_semantics = [#tpu.dimension_semantics<parallel>], iteration_bounds = array<i64: 1>, scalar_prefetch = 0 : i64, scratch_operands = 0 : i64, tpu.core_type = #tpu.core_type<tc>, window_params = [{pipeline_mode = #tpu.pipeline_mode<synchronous>, transform_indices = @transform_0, window_bounds = array<i64: 32, 16>}, {pipeline_mode = #tpu.pipeline_mode<synchronous>, transform_indices = @transform_1, window_bounds = array<i64: 32, 16>}, {pipeline_mode = #tpu.pipeline_mode<synchronous>, transform_indices = @transform_2, window_bounds = array<i64: 16, 256>}, {pipeline_mode = #tpu.pipeline_mode<synchronous>, transform_indices = @transform_3, window_bounds = array<i64: 16, 256>}, {pipeline_mode = #tpu.pipeline_mode<synchronous>, transform_indices = @transform_4, window_bounds = array<i64: 2, 64, 256>}]} {
    %c0 = arith.constant 0 : index
    %c0_0 = arith.constant 0 : index
    %0 = vector.load %arg1[%c0, %c0_0] : memref<32x16xf32, #tpu.memory_space<vmem>>, vector<32x16xf32>
    %c0_1 = arith.constant 0 : index
    %c0_2 = arith.constant 0 : index
    %1 = vector.load %arg3[%c0_1, %c0_2] : memref<16x256xf32, #tpu.memory_space<vmem>>, vector<16x256xf32>
    %cst = arith.constant dense<0.000000e+00> : vector<32x256xf32>
    %2 = tpu.matmul %0, %1, %cst {dimension_numbers = #tpu.dot_dimension_numbers<[1], [0], [0], [1], [0, 0, 1, 1], [], []>, precision = #tpu.contract_precision<fp32>} : vector<32x16xf32>, vector<16x256xf32>, vector<32x256xf32> -> vector<32x256xf32>
    %c0_3 = arith.constant 0 : index
    %c0_4 = arith.constant 0 : index
    %3 = vector.load %arg2[%c0_3, %c0_4] : memref<32x16xf32, #tpu.memory_space<vmem>>, vector<32x16xf32>
    %c0_5 = arith.constant 0 : index
    %c0_6 = arith.constant 0 : index
    %4 = vector.load %arg4[%c0_5, %c0_6] : memref<16x256xf32, #tpu.memory_space<vmem>>, vector<16x256xf32>
    %cst_7 = arith.constant dense<0.000000e+00> : vector<32x256xf32>
    %5 = tpu.matmul %3, %4, %cst_7 {dimension_numbers = #tpu.dot_dimension_numbers<[1], [0], [0], [1], [0, 0, 1, 1], [], []>, precision = #tpu.contract_precision<fp32>} : vector<32x16xf32>, vector<16x256xf32>, vector<32x256xf32> -> vector<32x256xf32>
    %c0_8 = arith.constant 0 : index
    %c0_9 = arith.constant 0 : index
    %c0_10 = arith.constant 0 : index
    %6 = vector.load %arg5[%c0_8, %c0_9, %c0_10] : memref<2x64x256xf32, #tpu.memory_space<vmem>>, vector<1x32x256xf32>
    %7 = vector.shape_cast %6 : vector<1x32x256xf32> to vector<32x256xf32>
    %8 = vector.shape_cast %2 : vector<32x256xf32> to vector<1x32x256xf32>
    tpu.vector_store %arg5[%c0_8, %c0_9, %c0_10], %8 {strides = array<i32>} : memref<2x64x256xf32, #tpu.memory_space<vmem>>, vector<1x32x256xf32>,
    %c0_11 = arith.constant 0 : index
    %c32 = arith.constant 32 : index
    %c0_12 = arith.constant 0 : index
    %9 = vector.load %arg5[%c0_11, %c32, %c0_12] : memref<2x64x256xf32, #tpu.memory_space<vmem>>, vector<1x32x256xf32>
    %10 = vector.shape_cast %9 : vector<1x32x256xf32> to vector<32x256xf32>
    %11 = vector.shape_cast %5 : vector<32x256xf32> to vector<1x32x256xf32>
    tpu.vector_store %arg5[%c0_11, %c32, %c0_12], %11 {strides = array<i32>} : memref<2x64x256xf32, #tpu.memory_space<vmem>>, vector<1x32x256xf32>,
    %c1 = arith.constant 1 : index
    %c0_13 = arith.constant 0 : index
    %c0_14 = arith.constant 0 : index
    %12 = vector.load %arg5[%c1, %c0_13, %c0_14] : memref<2x64x256xf32, #tpu.memory_space<vmem>>, vector<1x32x256xf32>
    %13 = vector.shape_cast %12 : vector<1x32x256xf32> to vector<32x256xf32>
    %14 = vector.shape_cast %2 : vector<32x256xf32> to vector<1x32x256xf32>
    tpu.vector_store %arg5[%c1, %c0_13, %c0_14], %14 {strides = array<i32>} : memref<2x64x256xf32, #tpu.memory_space<vmem>>, vector<1x32x256xf32>,
    %c1_15 = arith.constant 1 : index
    %c32_16 = arith.constant 32 : index
    %c0_17 = arith.constant 0 : index
    %15 = vector.load %arg5[%c1_15, %c32_16, %c0_17] : memref<2x64x256xf32, #tpu.memory_space<vmem>>, vector<1x32x256xf32>
    %16 = vector.shape_cast %15 : vector<1x32x256xf32> to vector<32x256xf32>
    %17 = vector.shape_cast %5 : vector<32x256xf32> to vector<1x32x256xf32>
    tpu.vector_store %arg5[%c1_15, %c32_16, %c0_17], %17 {strides = array<i32>} : memref<2x64x256xf32, #tpu.memory_space<vmem>>, vector<1x32x256xf32>,
    return
  }
  func.func @transform_0(%arg0: i32) -> (i32, i32) {
    %c0_i32 = arith.constant 0 : i32
    %c0_i32_0 = arith.constant 0 : i32
    %c0_i32_1 = arith.constant 0 : i32
    return %c0_i32, %c0_i32_0 : i32, i32
  }
  func.func @transform_1(%arg0: i32) -> (i32, i32) {
    %c0_i32 = arith.constant 0 : i32
    %c0_i32_0 = arith.constant 0 : i32
    %c0_i32_1 = arith.constant 0 : i32
    return %c0_i32, %c0_i32_0 : i32, i32
  }
  func.func @transform_2(%arg0: i32) -> (i32, i32) {
    %c0_i32 = arith.constant 0 : i32
    %c0_i32_0 = arith.constant 0 : i32
    %c0_i32_1 = arith.constant 0 : i32
    return %c0_i32, %c0_i32_0 : i32, i32
  }
  func.func @transform_3(%arg0: i32) -> (i32, i32) {
    %c0_i32 = arith.constant 0 : i32
    %c0_i32_0 = arith.constant 0 : i32
    %c0_i32_1 = arith.constant 0 : i32
    return %c0_i32, %c0_i32_0 : i32, i32
  }
  func.func @transform_4(%arg0: i32) -> (i32, i32, i32) {
    %c0_i32 = arith.constant 0 : i32
    %c0_i32_0 = arith.constant 0 : i32
    %c0_i32_1 = arith.constant 0 : i32
    %c0_i32_2 = arith.constant 0 : i32
    return %c0_i32, %c0_i32_0, %c0_i32_1 : i32, i32, i32
  }
}

</mosaic_0001>

<llo_original>
// kernel: position_embedding_learned.1
$region0: #{position_embedding_learned.1}
  #allocation0 [shape = 'u32[]', space=smem, size = 0x4, offset = 0x4, fixed_abs, tag = 'smem constant byte address 0x4 - core index']
  #allocation1 [shape = 'u32[144,128]{1,0:T(1,128)}', space=vmem, size = 0x12000, scoped, tag = 'internal scratch']
  %s0 = inlined_call_operand.vmem [shape: f32[32,16], index: 0, kind: input, shape index: {}]
  %s1 = inlined_call_operand.vmem [shape: f32[32,16], index: 1, kind: input, shape index: {}]
  %s2 = inlined_call_operand.vmem [shape: f32[16,256], index: 2, kind: input, shape index: {}]
  %s3 = inlined_call_operand.vmem [shape: f32[16,256], index: 3, kind: input, shape index: {}]
  %s4 = inlined_call_operand.vmem [shape: f32[2,64,256], index: 4, kind: output, shape index: {}]
  %s5 = sld [smem:[#allocation0]]
  $region26: #{position_embedding_learned.1} parent=0
    _
  %s7 = ssub.s32 1, %s5
  %s8 = scalar_select 0, %s7, %s5
  // Predicated region
  $region2: #{position_embedding_learned.1} parent=0 // pred_check
    _
  $region3: #{position_embedding_learned.1} parent=0 // pred_check_branch
    %10 = sbr.rel (0) target = $region5
  $region4: #{position_embedding_learned.1} parent=0 // pred_region
    _
  $region5: #{position_embedding_learned.1} parent=0 // pred_fallthru
    _
  // Predicated region
  $region6: #{position_embedding_learned.1} parent=0 // pred_check
    _
  $region7: #{position_embedding_learned.1} parent=0 // pred_check_branch
    %12 = sbr.rel (0) target = $region9
  $region8: #{position_embedding_learned.1} parent=0 // pred_region
    _
  $region9: #{position_embedding_learned.1} parent=0 // pred_fallthru
    _
  // Predicated region
  $region10: #{position_embedding_learned.1} parent=0 // pred_check
    _
  $region11: #{position_embedding_learned.1} parent=0 // pred_check_branch
    %14 = sbr.rel (0) target = $region13
  $region12: #{position_embedding_learned.1} parent=0 // pred_region
    _
  $region13: #{position_embedding_learned.1} parent=0 // pred_fallthru
    _
  // Predicated region
  $region14: #{position_embedding_learned.1} parent=0 // pred_check
    _
  $region15: #{position_embedding_learned.1} parent=0 // pred_check_branch
    %16 = sbr.rel (0) target = $region17
  $region16: #{position_embedding_learned.1} parent=0 // pred_region
    _
  $region17: #{position_embedding_learned.1} parent=0 // pred_fallthru
    _
  %v17 = vld [vmem:[%s0] sm:$0xff]
  %v18 = vld [vmem:[%s0 + $0x8] sm:$0xff]
  %v19 = vld [vmem:[%s0 + $0x10] sm:$0xff]
  %v20 = vld [vmem:[%s0 + $0x18] sm:$0xff]
  %v21 = vld [vmem:[%s2] sm:$0xff]
  %v22 = vld [vmem:[%s2 + $0x8] sm:$0xff]
  %v23 = vld [vmem:[%s2 + $0x10] sm:$0xff]
  %v24 = vld [vmem:[%s2 + $0x18] sm:$0xff]
  %vm25 = vcmask 130048
  %v27 = vsel %vm25, %v17, 0
  %v30 = vsel %vm25, %v18, 0
  %v33 = vsel %vm25, %v19, 0
  %v36 = vsel %vm25, %v20, 0
  %v38 = vand.u32 %v22, 4294901760
  %39 = vmatprep.subr.mxu0 %v38
  %v40 = vand.u32 %v21, 4294901760
  %41 = vmatpush1.msra.mxu0 %v40
  %v42 = vand.u32 %v24, 4294901760
  %43 = vmatprep.subr.mxu0 %v42
  %v44 = vand.u32 %v23, 4294901760
  %45 = vmatpush1.msra.mxu0 %v44
  %46 = vmatprep.subr.mxu0 0.0
  %47 = vmatpush1.msra.mxu0 0.0
  %48 = vmatprep.subr.mxu0 0.0
  %49 = vmatpush1.msra.mxu0 0.0
  %50 = vmatprep.subr.mxu0 0.0
  %51 = vmatpush1.msra.mxu0 0.0
  %52 = vmatprep.subr.mxu0 0.0
  %53 = vmatpush1.msra.mxu0 0.0
  %54 = vmatprep.subr.mxu0 0.0
  %55 = vmatpush1.msra.mxu0 0.0
  %56 = vmatprep.subr.mxu0 0.0
  %57 = vmatpush1.msra.mxu0 0.0
  %58 = vmatprep.subr.mxu0 0.0
  %59 = vmatpush1.msra.mxu0 0.0
  %60 = vmatprep.subr.mxu0 0.0
  %61 = vmatpush1.msra.mxu0 0.0
  %62 = vmatprep.subr.mxu0 0.0
  %63 = vmatpush1.msra.mxu0 0.0
  %64 = vmatprep.subr.mxu0 0.0
  %65 = vmatpush1.msra.mxu0 0.0
  %66 = vmatprep.subr.mxu0 0.0
  %67 = vmatpush1.msra.mxu0 0.0
  %68 = vmatprep.subr.mxu0 0.0
  %69 = vmatpush1.msra.mxu0 0.0
  %70 = vmatprep.subr.mxu0 0.0
  %71 = vmatpush1.msra.mxu0 0.0
  %72 = vmatprep.subr.mxu0 0.0
  %73 = vmatpush1.msra.mxu0 0.0
  %74 = vmatprep.subr.mxu0 0.0
  %75 = vmatpush1.msra.mxu0 0.0
  %76 = vmatprep.subr.mxu0 0.0
  %77 = vmatpush1.msra.mxu0 0.0
  %78 = vmatprep.subr.mxu0 0.0
  %79 = vmatpush1.msra.mxu0 0.0
  %80 = vmatprep.subr.mxu0 0.0
  %81 = vmatpush1.msra.mxu0 0.0
  %82 = vmatprep.subr.mxu0 0.0
  %83 = vmatpush1.msra.mxu0 0.0
  %84 = vmatprep.subr.mxu0 0.0
  %85 = vmatpush1.msra.mxu0 0.0
  %86 = vmatprep.subr.mxu0 0.0
  %87 = vmatpush1.msra.mxu0 0.0
  %88 = vmatprep.subr.mxu0 0.0
  %89 = vmatpush1.msra.mxu0 0.0
  %90 = vmatprep.subr.mxu0 0.0
  %91 = vmatpush1.msra.mxu0 0.0
  %92 = vmatprep.subr.mxu0 0.0
  %93 = vmatpush1.msra.mxu0 0.0
  %94 = vmatprep.subr.mxu0 0.0
  %95 = vmatpush1.msra.mxu0 0.0
  %96 = vmatprep.subr.mxu0 0.0
  %97 = vmatpush1.msra.mxu0 0.0
  %98 = vmatprep.subr.mxu0 0.0
  %99 = vmatpush1.msra.mxu0 0.0
  %100 = vmatprep.subr.mxu0 0.0
  %101 = vmatpush1.msra.mxu0 0.0
  %102 = vmatprep.subr.mxu0 0.0
  %103 = vmatpush1.msra.mxu0 0.0
  %104 = vmatprep.subr.mxu0 0.0
  %105 = vmatpush1.msra.mxu0 0.0
  %106 = vmatprep.mubr.f32.mxu0 0.0
  %v107 = vand.u32 %v27, 4294901760
  %v108 = vsub.f32 %v27, %v107
  %v109 = vand.u32 %v108, 4294901760
  %v110 = vsub.f32 %v108, %v109
  %v111 = vand.u32 %v110, 4294901760
  %112 = vmatmul.mubr.f32.gmra.mrb[0].mxu0 %v111
  %v113 = vpop.f32.mrb[0].mxu0
  %v114 = vadd.f32 0.0, %v113
  %v115 = vpop.f32.mrb[0].mxu0
  %v116 = vadd.f32 0.0, %v115
  %117 = vmatprep.mubr.f32.mxu0 0.0
  %v118 = vand.u32 %v30, 4294901760
  %v119 = vsub.f32 %v30, %v118
  %v120 = vand.u32 %v119, 4294901760
  %v121 = vsub.f32 %v119, %v120
  %v122 = vand.u32 %v121, 4294901760
  %123 = vmatmul.mubr.f32.gmra.mrb[0].mxu0 %v122
  %v124 = vpop.f32.mrb[0].mxu0
  %v125 = vadd.f32 0.0, %v124
  %v126 = vpop.f32.mrb[0].mxu0
  %v127 = vadd.f32 0.0, %v126
  %128 = vmatprep.mubr.f32.mxu0 0.0
  %v129 = vand.u32 %v33, 4294901760
  %v130 = vsub.f32 %v33, %v129
  %v131 = vand.u32 %v130, 4294901760
  %v132 = vsub.f32 %v130, %v131
  %v133 = vand.u32 %v132, 4294901760
  %134 = vmatmul.mubr.f32.gmra.mrb[0].mxu0 %v133
  %v135 = vpop.f32.mrb[0].mxu0
  %v136 = vadd.f32 0.0, %v135
  %v137 = vpop.f32.mrb[0].mxu0
  %v138 = vadd.f32 0.0, %v137
  %139 = vmatprep.mubr.f32.mxu0 0.0
  %v140 = vand.u32 %v36, 4294901760
  %v141 = vsub.f32 %v36, %v140
  %v142 = vand.u32 %v141, 4294901760
  %v143 = vsub.f32 %v141, %v142
  %v144 = vand.u32 %v143, 4294901760
  %145 = vmatmul.mubr.f32.gmra.mrb[0].mxu0 %v144
  %v146 = vpop.f32.mrb[0].mxu0
  %v147 = vadd.f32 0.0, %v146
  %v148 = vpop.f32.mrb[0].mxu0
  %v149 = vadd.f32 0.0, %v148
  %150 = vdwg.mxu0
  %v151 = vand.u32 %v22, 4294901760
  %v152 = vsub.f32 %v22, %v151
  %v153 = vand.u32 %v152, 4294901760
  %v154 = vsub.f32 %v152, %v153
  %v155 = vand.u32 %v154, 4294901760
  %156 = vmatprep.subr.mxu0 %v155
  %v157 = vand.u32 %v21, 4294901760
  %v158 = vsub.f32 %v21, %v157
  %v159 = vand.u32 %v158, 4294901760
  %v160 = vsub.f32 %v158, %v159
  %v161 = vand.u32 %v160, 4294901760
  %162 = vmatpush1.msra.mxu0 %v161
  %v163 = vand.u32 %v24, 4294901760
  %v164 = vsub.f32 %v24, %v163
  %v165 = vand.u32 %v164, 4294901760
  %v166 = vsub.f32 %v164, %v165
  %v167 = vand.u32 %v166, 4294901760
  %168 = vmatprep.subr.mxu0 %v167
  %v169 = vand.u32 %v23, 4294901760
  %v170 = vsub.f32 %v23, %v169
  %v171 = vand.u32 %v170, 4294901760
  %v172 = vsub.f32 %v170, %v171
  %v173 = vand.u32 %v172, 4294901760
  %174 = vmatpush1.msra.mxu0 %v173
  %175 = vmatprep.subr.mxu0 0.0
  %176 = vmatpush1.msra.mxu0 0.0
  %177 = vmatprep.subr.mxu0 0.0
  %178 = vmatpush1.msra.mxu0 0.0
  %179 = vmatprep.subr.mxu0 0.0
  %180 = vmatpush1.msra.mxu0 0.0
  %181 = vmatprep.subr.mxu0 0.0
  %182 = vmatpush1.msra.mxu0 0.0
  %183 = vmatprep.subr.mxu0 0.0
  %184 = vmatpush1.msra.mxu0 0.0
  %185 = vmatprep.subr.mxu0 0.0
  %186 = vmatpush1.msra.mxu0 0.0
  %187 = vmatprep.subr.mxu0 0.0
  %188 = vmatpush1.msra.mxu0 0.0
  %189 = vmatprep.subr.mxu0 0.0
  %190 = vmatpush1.msra.mxu0 0.0
  %191 = vmatprep.subr.mxu0 0.0
  %192 = vmatpush1.msra.mxu0 0.0
  %193 = vmatprep.subr.mxu0 0.0
  %194 = vmatpush1.msra.mxu0 0.0
  %195 = vmatprep.subr.mxu0 0.0
  %196 = vmatpush1.msra.mxu0 0.0
  %197 = vmatprep.subr.mxu0 0.0
  %198 = vmatpush1.msra.mxu0 0.0
  %199 = vmatprep.subr.mxu0 0.0
  %200 = vmatpush1.msra.mxu0 0.0
  %201 = vmatprep.subr.mxu0 0.0
  %202 = vmatpush1.msra.mxu0 0.0
  %203 = vmatprep.subr.mxu0 0.0
  %204 = vmatpush1.msra.mxu0 0.0
  %205 = vmatprep.subr.mxu0 0.0
  %206 = vmatpush1.msra.mxu0 0.0
  %207 = vmatprep.subr.mxu0 0.0
  %208 = vmatpush1.msra.mxu0 0.0
  %209 = vmatprep.subr.mxu0 0.0
  %210 = vmatpush1.msra.mxu0 0.0
  %211 = vmatprep.subr.mxu0 0.0
  %212 = vmatpush1.msra.mxu0 0.0
  %213 = vmatprep.subr.mxu0 0.0
  %214 = vmatpush1.msra.mxu0 0.0
  %215 = vmatprep.subr.mxu0 0.0
  %216 = vmatpush1.msra.mxu0 0.0
  %217 = vmatprep.subr.mxu0 0.0
  %218 = vmatpush1.msra.mxu0 0.0
  %219 = vmatprep.subr.mxu0 0.0
  %220 = vmatpush1.msra.mxu0 0.0
  %221 = vmatprep.subr.mxu0 0.0
  %222 = vmatpush1.msra.mxu0 0.0
  %223 = vmatprep.subr.mxu0 0.0
  %224 = vmatpush1.msra.mxu0 0.0
  %225 = vmatprep.subr.mxu0 0.0
  %226 = vmatpush1.msra.mxu0 0.0
  %227 = vmatprep.subr.mxu0 0.0
  %228 = vmatpush1.msra.mxu0 0.0
  %229 = vmatprep.subr.mxu0 0.0
  %230 = vmatpush1.msra.mxu0 0.0
  %231 = vmatprep.subr.mxu0 0.0
  %232 = vmatpush1.msra.mxu0 0.0
  %233 = vmatprep.subr.mxu0 0.0
  %234 = vmatpush1.msra.mxu0 0.0
  %235 = vmatprep.mubr.f32.mxu0 0.0
  %v236 = vand.u32 %v27, 4294901760
  %237 = vmatmul.mubr.f32.gmra.mrb[0].mxu0 %v236
  %v238 = vpop.f32.mrb[0].mxu0
  %v239 = vadd.f32 %v114, %v238
  %v240 = vpop.f32.mrb[0].mxu0
  %v241 = vadd.f32 %v116, %v240
  %242 = vmatprep.mubr.f32.mxu0 0.0
  %v243 = vand.u32 %v30, 4294901760
  %244 = vmatmul.mubr.f32.gmra.mrb[0].mxu0 %v243
  %v245 = vpop.f32.mrb[0].mxu0
  %v246 = vadd.f32 %v125, %v245
  %v247 = vpop.f32.mrb[0].mxu0
  %v248 = vadd.f32 %v127, %v247
  %249 = vmatprep.mubr.f32.mxu0 0.0
  %v250 = vand.u32 %v33, 4294901760
  %251 = vmatmul.mubr.f32.gmra.mrb[0].mxu0 %v250
  %v252 = vpop.f32.mrb[0].mxu0
  %v253 = vadd.f32 %v136, %v252
  %v254 = vpop.f32.mrb[0].mxu0
  %v255 = vadd.f32 %v138, %v254
  %256 = vmatprep.mubr.f32.mxu0 0.0
  %v257 = vand.u32 %v36, 4294901760
  %258 = vmatmul.mubr.f32.gmra.mrb[0].mxu0 %v257
  %v259 = vpop.f32.mrb[0].mxu0
  %v260 = vadd.f32 %v147, %v259
  %v261 = vpop.f32.mrb[0].mxu0
  %v262 = vadd.f32 %v149, %v261
  %263 = vdwg.mxu0
  %v264 = vand.u32 %v22, 4294901760
  %v265 = vsub.f32 %v22, %v264
  %266 = vmatprep.subr.mxu0 %v265
  %v267 = vand.u32 %v21, 4294901760
  %v268 = vsub.f32 %v21, %v267
  %269 = vmatpush1.msra.mxu0 %v268
  %v270 = vand.u32 %v24, 4294901760
  %v271 = vsub.f32 %v24, %v270
  %272 = vmatprep.subr.mxu0 %v271
  %v273 = vand.u32 %v23, 4294901760
  %v274 = vsub.f32 %v23, %v273
  %275 = vmatpush1.msra.mxu0 %v274
  %276 = vmatprep.subr.mxu0 0.0
  %277 = vmatpush1.msra.mxu0 0.0
  %278 = vmatprep.subr.mxu0 0.0
  %279 = vmatpush1.msra.mxu0 0.0
  %280 = vmatprep.subr.mxu0 0.0
  %281 = vmatpush1.msra.mxu0 0.0
  %282 = vmatprep.subr.mxu0 0.0
  %283 = vmatpush1.msra.mxu0 0.0
  %284 = vmatprep.subr.mxu0 0.0
  %285 = vmatpush1.msra.mxu0 0.0
  %286 = vmatprep.subr.mxu0 0.0
  %287 = vmatpush1.msra.mxu0 0.0
  %288 = vmatprep.subr.mxu0 0.0
  %289 = vmatpush1.msra.mxu0 0.0
  %290 = vmatprep.subr.mxu0 0.0
  %291 = vmatpush1.msra.mxu0 0.0
  %292 = vmatprep.subr.mxu0 0.0
  %293 = vmatpush1.msra.mxu0 0.0
  %294 = vmatprep.subr.mxu0 0.0
  %295 = vmatpush1.msra.mxu0 0.0
  %296 = vmatprep.subr.mxu0 0.0
  %297 = vmatpush1.msra.mxu0 0.0
  %298 = vmatprep.subr.mxu0 0.0
  %299 = vmatpush1.msra.mxu0 0.0
  %300 = vmatprep.subr.mxu0 0.0
  %301 = vmatpush1.msra.mxu0 0.0
  %302 = vmatprep.subr.mxu0 0.0
  %303 = vmatpush1.msra.mxu0 0.0
  %304 = vmatprep.subr.mxu0 0.0
  %305 = vmatpush1.msra.mxu0 0.0
  %306 = vmatprep.subr.mxu0 0.0
  %307 = vmatpush1.msra.mxu0 0.0
  %308 = vmatprep.subr.mxu0 0.0
  %309 = vmatpush1.msra.mxu0 0.0
  %310 = vmatprep.subr.mxu0 0.0
  %311 = vmatpush1.msra.mxu0 0.0
  %312 = vmatprep.subr.mxu0 0.0
  %313 = vmatpush1.msra.mxu0 0.0
  %314 = vmatprep.subr.mxu0 0.0
  %315 = vmatpush1.msra.mxu0 0.0
  %316 = vmatprep.subr.mxu0 0.0
  %317 = vmatpush1.msra.mxu0 0.0
  %318 = vmatprep.subr.mxu0 0.0
  %319 = vmatpush1.msra.mxu0 0.0
  %320 = vmatprep.subr.mxu0 0.0
  %321 = vmatpush1.msra.mxu0 0.0
  %322 = vmatprep.subr.mxu0 0.0
  %323 = vmatpush1.msra.mxu0 0.0
  %324 = vmatprep.subr.mxu0 0.0
  %325 = vmatpush1.msra.mxu0 0.0
  %326 = vmatprep.subr.mxu0 0.0
  %327 = vmatpush1.msra.mxu0 0.0
  %328 = vmatprep.subr.mxu0 0.0
  %329 = vmatpush1.msra.mxu0 0.0
  %330 = vmatprep.subr.mxu0 0.0
  %331 = vmatpush1.msra.mxu0 0.0
  %332 = vmatprep.subr.mxu0 0.0
  %333 = vmatpush1.msra.mxu0 0.0
  %334 = vmatprep.subr.mxu0 0.0
  %335 = vmatpush1.msra.mxu0 0.0
  %336 = vmatprep.mubr.f32.mxu0 0.0
  %v337 = vand.u32 %v27, 4294901760
  %v338 = vsub.f32 %v27, %v337
  %339 = vmatmul.mubr.f32.gmra.mrb[0].mxu0 %v338
  %v340 = vpop.f32.mrb[0].mxu0
  %v341 = vadd.f32 %v239, %v340
  %v342 = vpop.f32.mrb[0].mxu0
  %v343 = vadd.f32 %v241, %v342
  %344 = vmatprep.mubr.f32.mxu0 0.0
  %v345 = vand.u32 %v30, 4294901760
  %v346 = vsub.f32 %v30, %v345
  %347 = vmatmul.mubr.f32.gmra.mrb[0].mxu0 %v346
  %v348 = vpop.f32.mrb[0].mxu0
  %v349 = vadd.f32 %v246, %v348
  %v350 = vpop.f32.mrb[0].mxu0
  %v351 = vadd.f32 %v248, %v350
  %352 = vmatprep.mubr.f32.mxu0 0.0
  %v353 = vand.u32 %v33, 4294901760
  %v354 = vsub.f32 %v33, %v353
  %355 = vmatmul.mubr.f32.gmra.mrb[0].mxu0 %v354
  %v356 = vpop.f32.mrb[0].mxu0
  %v357 = vadd.f32 %v253, %v356
  %v358 = vpop.f32.mrb[0].mxu0
  %v359 = vadd.f32 %v255, %v358
  %360 = vmatprep.mubr.f32.mxu0 0.0
  %v361 = vand.u32 %v36, 4294901760
  %v362 = vsub.f32 %v36, %v361
  %363 = vmatmul.mubr.f32.gmra.mrb[0].mxu0 %v362
  %v364 = vpop.f32.mrb[0].mxu0
  %v365 = vadd.f32 %v260, %v364
  %v366 = vpop.f32.mrb[0].mxu0
  %v367 = vadd.f32 %v262, %v366
  %368 = vdwg.mxu0
  %v369 = vand.u32 %v22, 4294901760
  %370 = vmatprep.subr.mxu0 %v369
  %v371 = vand.u32 %v21, 4294901760
  %372 = vmatpush1.msra.mxu0 %v371
  %v373 = vand.u32 %v24, 4294901760
  %374 = vmatprep.subr.mxu0 %v373
  %v375 = vand.u32 %v23, 4294901760
  %376 = vmatpush1.msra.mxu0 %v375
  %377 = vmatprep.subr.mxu0 0.0
  %378 = vmatpush1.msra.mxu0 0.0
  %379 = vmatprep.subr.mxu0 0.0
  %380 = vmatpush1.msra.mxu0 0.0
  %381 = vmatprep.subr.mxu0 0.0
  %382 = vmatpush1.msra.mxu0 0.0
  %383 = vmatprep.subr.mxu0 0.0
  %384 = vmatpush1.msra.mxu0 0.0
  %385 = vmatprep.subr.mxu0 0.0
  %386 = vmatpush1.msra.mxu0 0.0
  %387 = vmatprep.subr.mxu0 0.0
  %388 = vmatpush1.msra.mxu0 0.0
  %389 = vmatprep.subr.mxu0 0.0
  %390 = vmatpush1.msra.mxu0 0.0
  %391 = vmatprep.subr.mxu0 0.0
  %392 = vmatpush1.msra.mxu0 0.0
  %393 = vmatprep.subr.mxu0 0.0
  %394 = vmatpush1.msra.mxu0 0.0
  %395 = vmatprep.subr.mxu0 0.0
  %396 = vmatpush1.msra.mxu0 0.0
  %397 = vmatprep.subr.mxu0 0.0
  %398 = vmatpush1.msra.mxu0 0.0
  %399 = vmatprep.subr.mxu0 0.0
  %400 = vmatpush1.msra.mxu0 0.0
  %401 = vmatprep.subr.mxu0 0.0
  %402 = vmatpush1.msra.mxu0 0.0
  %403 = vmatprep.subr.mxu0 0.0
  %404 = vmatpush1.msra.mxu0 0.0
  %405 = vmatprep.subr.mxu0 0.0
  %406 = vmatpush1.msra.mxu0 0.0
  %407 = vmatprep.subr.mxu0 0.0
  %408 = vmatpush1.msra.mxu0 0.0
  %409 = vmatprep.subr.mxu0 0.0
  %410 = vmatpush1.msra.mxu0 0.0
  %411 = vmatprep.subr.mxu0 0.0
  %412 = vmatpush1.msra.mxu0 0.0
  %413 = vmatprep.subr.mxu0 0.0
  %414 = vmatpush1.msra.mxu0 0.0
  %415 = vmatprep.subr.mxu0 0.0
  %416 = vmatpush1.msra.mxu0 0.0
  %417 = vmatprep.subr.mxu0 0.0
  %418 = vmatpush1.msra.mxu0 0.0
  %419 = vmatprep.subr.mxu0 0.0
  %420 = vmatpush1.msra.mxu0 0.0
  %421 = vmatprep.subr.mxu0 0.0
  %422 = vmatpush1.msra.mxu0 0.0
  %423 = vmatprep.subr.mxu0 0.0
  %424 = vmatpush1.msra.mxu0 0.0
  %425 = vmatprep.subr.mxu0 0.0
  %426 = vmatpush1.msra.mxu0 0.0
  %427 = vmatprep.subr.mxu0 0.0
  %428 = vmatpush1.msra.mxu0 0.0
  %429 = vmatprep.subr.mxu0 0.0
  %430 = vmatpush1.msra.mxu0 0.0
  %431 = vmatprep.subr.mxu0 0.0
  %432 = vmatpush1.msra.mxu0 0.0
  %433 = vmatprep.subr.mxu0 0.0
  %434 = vmatpush1.msra.mxu0 0.0
  %435 = vmatprep.subr.mxu0 0.0
  %436 = vmatpush1.msra.mxu0 0.0
  %437 = vmatprep.mubr.f32.mxu0 0.0
  %v438 = vand.u32 %v27, 4294901760
  %v439 = vsub.f32 %v27, %v438
  %v440 = vand.u32 %v439, 4294901760
  %441 = vmatmul.mubr.f32.gmra.mrb[0].mxu0 %v440
  %v442 = vpop.f32.mrb[0].mxu0
  %v443 = vadd.f32 %v341, %v442
  %v444 = vpop.f32.mrb[0].mxu0
  %v445 = vadd.f32 %v343, %v444
  %446 = vmatprep.mubr.f32.mxu0 0.0
  %v447 = vand.u32 %v30, 4294901760
  %v448 = vsub.f32 %v30, %v447
  %v449 = vand.u32 %v448, 4294901760
  %450 = vmatmul.mubr.f32.gmra.mrb[0].mxu0 %v449
  %v451 = vpop.f32.mrb[0].mxu0
  %v452 = vadd.f32 %v349, %v451
  %v453 = vpop.f32.mrb[0].mxu0
  %v454 = vadd.f32 %v351, %v453
  %455 = vmatprep.mubr.f32.mxu0 0.0
  %v456 = vand.u32 %v33, 4294901760
  %v457 = vsub.f32 %v33, %v456
  %v458 = vand.u32 %v457, 4294901760
  %459 = vmatmul.mubr.f32.gmra.mrb[0].mxu0 %v458
  %v460 = vpop.f32.mrb[0].mxu0
  %v461 = vadd.f32 %v357, %v460
  %v462 = vpop.f32.mrb[0].mxu0
  %v463 = vadd.f32 %v359, %v462
  %464 = vmatprep.mubr.f32.mxu0 0.0
  %v465 = vand.u32 %v36, 4294901760
  %v466 = vsub.f32 %v36, %v465
  %v467 = vand.u32 %v466, 4294901760
  %468 = vmatmul.mubr.f32.gmra.mrb[0].mxu0 %v467
  %v469 = vpop.f32.mrb[0].mxu0
  %v470 = vadd.f32 %v365, %v469
  %v471 = vpop.f32.mrb[0].mxu0
  %v472 = vadd.f32 %v367, %v471
  %473 = vdwg.mxu0
  %v474 = vand.u32 %v22, 4294901760
  %v475 = vsub.f32 %v22, %v474
  %v476 = vand.u32 %v475, 4294901760
  %477 = vmatprep.subr.mxu0 %v476
  %v478 = vand.u32 %v21, 4294901760
  %v479 = vsub.f32 %v21, %v478
  %v480 = vand.u32 %v479, 4294901760
  %481 = vmatpush1.msra.mxu0 %v480
  %v482 = vand.u32 %v24, 4294901760
  %v483 = vsub.f32 %v24, %v482
  %v484 = vand.u32 %v483, 4294901760
  %485 = vmatprep.subr.mxu0 %v484
  %v486 = vand.u32 %v23, 4294901760
  %v487 = vsub.f32 %v23, %v486
  %v488 = vand.u32 %v487, 4294901760
  %489 = vmatpush1.msra.mxu0 %v488
  %490 = vmatprep.subr.mxu0 0.0
  %491 = vmatpush1.msra.mxu0 0.0
  %492 = vmatprep.subr.mxu0 0.0
  %493 = vmatpush1.msra.mxu0 0.0
  %494 = vmatprep.subr.mxu0 0.0
  %495 = vmatpush1.msra.mxu0 0.0
  %496 = vmatprep.subr.mxu0 0.0
  %497 = vmatpush1.msra.mxu0 0.0
  %498 = vmatprep.subr.mxu0 0.0
  %499 = vmatpush1.msra.mxu0 0.0
  %500 = vmatprep.subr.mxu0 0.0
  %501 = vmatpush1.msra.mxu0 0.0
  %502 = vmatprep.subr.mxu0 0.0
  %503 = vmatpush1.msra.mxu0 0.0
  %504 = vmatprep.subr.mxu0 0.0
  %505 = vmatpush1.msra.mxu0 0.0
  %506 = vmatprep.subr.mxu0 0.0
  %507 = vmatpush1.msra.mxu0 0.0
  %508 = vmatprep.subr.mxu0 0.0
  %509 = vmatpush1.msra.mxu0 0.0
  %510 = vmatprep.subr.mxu0 0.0
  %511 = vmatpush1.msra.mxu0 0.0
  %512 = vmatprep.subr.mxu0 0.0
  %513 = vmatpush1.msra.mxu0 0.0
  %514 = vmatprep.subr.mxu0 0.0
  %515 = vmatpush1.msra.mxu0 0.0
  %516 = vmatprep.subr.mxu0 0.0
  %517 = vmatpush1.msra.mxu0 0.0
  %518 = vmatprep.subr.mxu0 0.0
  %519 = vmatpush1.msra.mxu0 0.0
  %520 = vmatprep.subr.mxu0 0.0
  %521 = vmatpush1.msra.mxu0 0.0
  %522 = vmatprep.subr.mxu0 0.0
  %523 = vmatpush1.msra.mxu0 0.0
  %524 = vmatprep.subr.mxu0 0.0
  %525 = vmatpush1.msra.mxu0 0.0
  %526 = vmatprep.subr.mxu0 0.0
  %527 = vmatpush1.msra.mxu0 0.0
  %528 = vmatprep.subr.mxu0 0.0
  %529 = vmatpush1.msra.mxu0 0.0
  %530 = vmatprep.subr.mxu0 0.0
  %531 = vmatpush1.msra.mxu0 0.0
  %532 = vmatprep.subr.mxu0 0.0
  %533 = vmatpush1.msra.mxu0 0.0
  %534 = vmatprep.subr.mxu0 0.0
  %535 = vmatpush1.msra.mxu0 0.0
  %536 = vmatprep.subr.mxu0 0.0
  %537 = vmatpush1.msra.mxu0 0.0
  %538 = vmatprep.subr.mxu0 0.0
  %539 = vmatpush1.msra.mxu0 0.0
  %540 = vmatprep.subr.mxu0 0.0
  %541 = vmatpush1.msra.mxu0 0.0
  %542 = vmatprep.subr.mxu0 0.0
  %543 = vmatpush1.msra.mxu0 0.0
  %544 = vmatprep.subr.mxu0 0.0
  %545 = vmatpush1.msra.mxu0 0.0
  %546 = vmatprep.subr.mxu0 0.0
  %547 = vmatpush1.msra.mxu0 0.0
  %548 = vmatprep.subr.mxu0 0.0
  %549 = vmatpush1.msra.mxu0 0.0
  %550 = vmatprep.mubr.f32.mxu0 0.0
  %v551 = vand.u32 %v27, 4294901760
  %552 = vmatmul.mubr.f32.gmra.mrb[0].mxu0 %v551
  %v553 = vpop.f32.mrb[0].mxu0
  %v554 = vadd.f32 %v443, %v553
  %v555 = vpop.f32.mrb[0].mxu0
  %v556 = vadd.f32 %v445, %v555
  %557 = vmatprep.mubr.f32.mxu0 0.0
  %v558 = vand.u32 %v30, 4294901760
  %559 = vmatmul.mubr.f32.gmra.mrb[0].mxu0 %v558
  %v560 = vpop.f32.mrb[0].mxu0
  %v561 = vadd.f32 %v452, %v560
  %v562 = vpop.f32.mrb[0].mxu0
  %v563 = vadd.f32 %v454, %v562
  %564 = vmatprep.mubr.f32.mxu0 0.0
  %v565 = vand.u32 %v33, 4294901760
  %566 = vmatmul.mubr.f32.gmra.mrb[0].mxu0 %v565
  %v567 = vpop.f32.mrb[0].mxu0
  %v568 = vadd.f32 %v461, %v567
  %v569 = vpop.f32.mrb[0].mxu0
  %v570 = vadd.f32 %v463, %v569
  %571 = vmatprep.mubr.f32.mxu0 0.0
  %v572 = vand.u32 %v36, 4294901760
  %573 = vmatmul.mubr.f32.gmra.mrb[0].mxu0 %v572
  %v574 = vpop.f32.mrb[0].mxu0
  %v575 = vadd.f32 %v470, %v574
  %v576 = vpop.f32.mrb[0].mxu0
  %v577 = vadd.f32 %v472, %v576
  %578 = vdwg.mxu0
  %v579 = vand.u32 %v22, 4294901760
  %580 = vmatprep.subr.mxu0 %v579
  %v581 = vand.u32 %v21, 4294901760
  %582 = vmatpush1.msra.mxu0 %v581
  %v583 = vand.u32 %v24, 4294901760
  %584 = vmatprep.subr.mxu0 %v583
  %v585 = vand.u32 %v23, 4294901760
  %586 = vmatpush1.msra.mxu0 %v585
  %587 = vmatprep.subr.mxu0 0.0
  %588 = vmatpush1.msra.mxu0 0.0
  %589 = vmatprep.subr.mxu0 0.0
  %590 = vmatpush1.msra.mxu0 0.0
  %591 = vmatprep.subr.mxu0 0.0
  %592 = vmatpush1.msra.mxu0 0.0
  %593 = vmatprep.subr.mxu0 0.0
  %594 = vmatpush1.msra.mxu0 0.0
  %595 = vmatprep.subr.mxu0 0.0
  %596 = vmatpush1.msra.mxu0 0.0
  %597 = vmatprep.subr.mxu0 0.0
  %598 = vmatpush1.msra.mxu0 0.0
  %599 = vmatprep.subr.mxu0 0.0
  %600 = vmatpush1.msra.mxu0 0.0
  %601 = vmatprep.subr.mxu0 0.0
  %602 = vmatpush1.msra.mxu0 0.0
  %603 = vmatprep.subr.mxu0 0.0
  %604 = vmatpush1.msra.mxu0 0.0
  %605 = vmatprep.subr.mxu0 0.0
  %606 = vmatpush1.msra.mxu0 0.0
  %607 = vmatprep.subr.mxu0 0.0
  %608 = vmatpush1.msra.mxu0 0.0
  %609 = vmatprep.subr.mxu0 0.0
  %610 = vmatpush1.msra.mxu0 0.0
  %611 = vmatprep.subr.mxu0 0.0
  %612 = vmatpush1.msra.mxu0 0.0
  %613 = vmatprep.subr.mxu0 0.0
  %614 = vmatpush1.msra.mxu0 0.0
  %615 = vmatprep.subr.mxu0 0.0
  %616 = vmatpush1.msra.mxu0 0.0
  %617 = vmatprep.subr.mxu0 0.0
  %618 = vmatpush1.msra.mxu0 0.0
  %619 = vmatprep.subr.mxu0 0.0
  %620 = vmatpush1.msra.mxu0 0.0
  %621 = vmatprep.subr.mxu0 0.0
  %622 = vmatpush1.msra.mxu0 0.0
  %623 = vmatprep.subr.mxu0 0.0
  %624 = vmatpush1.msra.mxu0 0.0
  %625 = vmatprep.subr.mxu0 0.0
  %626 = vmatpush1.msra.mxu0 0.0
  %627 = vmatprep.subr.mxu0 0.0
  %628 = vmatpush1.msra.mxu0 0.0
  %629 = vmatprep.subr.mxu0 0.0
  %630 = vmatpush1.msra.mxu0 0.0
  %631 = vmatprep.subr.mxu0 0.0
  %632 = vmatpush1.msra.mxu0 0.0
  %633 = vmatprep.subr.mxu0 0.0
  %634 = vmatpush1.msra.mxu0 0.0
  %635 = vmatprep.subr.mxu0 0.0
  %636 = vmatpush1.msra.mxu0 0.0
  %637 = vmatprep.subr.mxu0 0.0
  %638 = vmatpush1.msra.mxu0 0.0
  %639 = vmatprep.subr.mxu0 0.0
  %640 = vmatpush1.msra.mxu0 0.0
  %641 = vmatprep.subr.mxu0 0.0
  %642 = vmatpush1.msra.mxu0 0.0
  %643 = vmatprep.subr.mxu0 0.0
  %644 = vmatpush1.msra.mxu0 0.0
  %645 = vmatprep.subr.mxu0 0.0
  %646 = vmatpush1.msra.mxu0 0.0
  %647 = vmatprep.mubr.f32.mxu0 0.0
  %v648 = vand.u32 %v27, 4294901760
  %649 = vmatmul.mubr.f32.gmra.mrb[0].mxu0 %v648
  %v650 = vpop.f32.mrb[0].mxu0
  %v651 = vadd.f32 %v554, %v650
  %v652 = vpop.f32.mrb[0].mxu0
  %v653 = vadd.f32 %v556, %v652
  %654 = vmatprep.mubr.f32.mxu0 0.0
  %v655 = vand.u32 %v30, 4294901760
  %656 = vmatmul.mubr.f32.gmra.mrb[0].mxu0 %v655
  %v657 = vpop.f32.mrb[0].mxu0
  %v658 = vadd.f32 %v561, %v657
  %v659 = vpop.f32.mrb[0].mxu0
  %v660 = vadd.f32 %v563, %v659
  %661 = vmatprep.mubr.f32.mxu0 0.0
  %v662 = vand.u32 %v33, 4294901760
  %663 = vmatmul.mubr.f32.gmra.mrb[0].mxu0 %v662
  %v664 = vpop.f32.mrb[0].mxu0
  %v665 = vadd.f32 %v568, %v664
  %v666 = vpop.f32.mrb[0].mxu0
  %v667 = vadd.f32 %v570, %v666
  %668 = vmatprep.mubr.f32.mxu0 0.0
  %v669 = vand.u32 %v36, 4294901760
  %670 = vmatmul.mubr.f32.gmra.mrb[0].mxu0 %v669
  %v671 = vpop.f32.mrb[0].mxu0
  %v672 = vadd.f32 %v575, %v671
  %v673 = vpop.f32.mrb[0].mxu0
  %v674 = vadd.f32 %v577, %v673
  %675 = vdwg.mxu0
  %v676 = vld [vmem:[%s1] sm:$0xff]
  %v677 = vld [vmem:[%s1 + $0x8] sm:$0xff]
  %v678 = vld [vmem:[%s1 + $0x10] sm:$0xff]
  %v679 = vld [vmem:[%s1 + $0x18] sm:$0xff]
  %v680 = vld [vmem:[%s3] sm:$0xff]
  %v681 = vld [vmem:[%s3 + $0x8] sm:$0xff]
  %v682 = vld [vmem:[%s3 + $0x10] sm:$0xff]
  %v683 = vld [vmem:[%s3 + $0x18] sm:$0xff]
  %v685 = vsel %vm25, %v676, 0
  %v688 = vsel %vm25, %v677, 0
  %v691 = vsel %vm25, %v678, 0
  %v694 = vsel %vm25, %v679, 0
  %v696 = vand.u32 %v681, 4294901760
  %697 = vmatprep.subr.mxu0 %v696
  %v698 = vand.u32 %v680, 4294901760
  %699 = vmatpush1.msra.mxu0 %v698
  %v700 = vand.u32 %v683, 4294901760
  %701 = vmatprep.subr.mxu0 %v700
  %v702 = vand.u32 %v682, 4294901760
  %703 = vmatpush1.msra.mxu0 %v702
  %704 = vmatprep.subr.mxu0 0.0
  %705 = vmatpush1.msra.mxu0 0.0
  %706 = vmatprep.subr.mxu0 0.0
  %707 = vmatpush1.msra.mxu0 0.0
  %708 = vmatprep.subr.mxu0 0.0
  %709 = vmatpush1.msra.mxu0 0.0
  %710 = vmatprep.subr.mxu0 0.0
  %711 = vmatpush1.msra.mxu0 0.0
  %712 = vmatprep.subr.mxu0 0.0
  %713 = vmatpush1.msra.mxu0 0.0
  %714 = vmatprep.subr.mxu0 0.0
  %715 = vmatpush1.msra.mxu0 0.0
  %716 = vmatprep.subr.mxu0 0.0
  %717 = vmatpush1.msra.mxu0 0.0
  %718 = vmatprep.subr.mxu0 0.0
  %719 = vmatpush1.msra.mxu0 0.0
  %720 = vmatprep.subr.mxu0 0.0
  %721 = vmatpush1.msra.mxu0 0.0
  %722 = vmatprep.subr.mxu0 0.0
  %723 = vmatpush1.msra.mxu0 0.0
  %724 = vmatprep.subr.mxu0 0.0
  %725 = vmatpush1.msra.mxu0 0.0
  %726 = vmatprep.subr.mxu0 0.0
  %727 = vmatpush1.msra.mxu0 0.0
  %728 = vmatprep.subr.mxu0 0.0
  %729 = vmatpush1.msra.mxu0 0.0
  %730 = vmatprep.subr.mxu0 0.0
  %731 = vmatpush1.msra.mxu0 0.0
  %732 = vmatprep.subr.mxu0 0.0
  %733 = vmatpush1.msra.mxu0 0.0
  %734 = vmatprep.subr.mxu0 0.0
  %735 = vmatpush1.msra.mxu0 0.0
  %736 = vmatprep.subr.mxu0 0.0
  %737 = vmatpush1.msra.mxu0 0.0
  %738 = vmatprep.subr.mxu0 0.0
  %739 = vmatpush1.msra.mxu0 0.0
  %740 = vmatprep.subr.mxu0 0.0
  %741 = vmatpush1.msra.mxu0 0.0
  %742 = vmatprep.subr.mxu0 0.0
  %743 = vmatpush1.msra.mxu0 0.0
  %744 = vmatprep.subr.mxu0 0.0
  %745 = vmatpush1.msra.mxu0 0.0
  %746 = vmatprep.subr.mxu0 0.0
  %747 = vmatpush1.msra.mxu0 0.0
  %748 = vmatprep.subr.mxu0 0.0
  %749 = vmatpush1.msra.mxu0 0.0
  %750 = vmatprep.subr.mxu0 0.0
  %751 = vmatpush1.msra.mxu0 0.0
  %752 = vmatprep.subr.mxu0 0.0
  %753 = vmatpush1.msra.mxu0 0.0
  %754 = vmatprep.subr.mxu0 0.0
  %755 = vmatpush1.msra.mxu0 0.0
  %756 = vmatprep.subr.mxu0 0.0
  %757 = vmatpush1.msra.mxu0 0.0
  %758 = vmatprep.subr.mxu0 0.0
  %759 = vmatpush1.msra.mxu0 0.0
  %760 = vmatprep.subr.mxu0 0.0
  %761 = vmatpush1.msra.mxu0 0.0
  %762 = vmatprep.subr.mxu0 0.0
  %763 = vmatpush1.msra.mxu0 0.0
  %764 = vmatprep.mubr.f32.mxu0 0.0
  %v765 = vand.u32 %v685, 4294901760
  %v766 = vsub.f32 %v685, %v765
  %v767 = vand.u32 %v766, 4294901760
  %v768 = vsub.f32 %v766, %v767
  %v769 = vand.u32 %v768, 4294901760
  %770 = vmatmul.mubr.f32.gmra.mrb[0].mxu0 %v769
  %v771 = vpop.f32.mrb[0].mxu0
  %v772 = vadd.f32 0.0, %v771
  %v773 = vpop.f32.mrb[0].mxu0
  %v774 = vadd.f32 0.0, %v773
  %775 = vmatprep.mubr.f32.mxu0 0.0
  %v776 = vand.u32 %v688, 4294901760
  %v777 = vsub.f32 %v688, %v776
  %v778 = vand.u32 %v777, 4294901760
  %v779 = vsub.f32 %v777, %v778
  %v780 = vand.u32 %v779, 4294901760
  %781 = vmatmul.mubr.f32.gmra.mrb[0].mxu0 %v780
  %v782 = vpop.f32.mrb[0].mxu0
  %v783 = vadd.f32 0.0, %v782
  %v784 = vpop.f32.mrb[0].mxu0
  %v785 = vadd.f32 0.0, %v784
  %786 = vmatprep.mubr.f32.mxu0 0.0
  %v787 = vand.u32 %v691, 4294901760
  %v788 = vsub.f32 %v691, %v787
  %v789 = vand.u32 %v788, 4294901760
  %v790 = vsub.f32 %v788, %v789
  %v791 = vand.u32 %v790, 4294901760
  %792 = vmatmul.mubr.f32.gmra.mrb[0].mxu0 %v791
  %v793 = vpop.f32.mrb[0].mxu0
  %v794 = vadd.f32 0.0, %v793
  %v795 = vpop.f32.mrb[0].mxu0
  %v796 = vadd.f32 0.0, %v795
  %797 = vmatprep.mubr.f32.mxu0 0.0
  %v798 = vand.u32 %v694, 4294901760
  %v799 = vsub.f32 %v694, %v798
  %v800 = vand.u32 %v799, 4294901760
  %v801 = vsub.f32 %v799, %v800
  %v802 = vand.u32 %v801, 4294901760
  %803 = vmatmul.mubr.f32.gmra.mrb[0].mxu0 %v802
  %v804 = vpop.f32.mrb[0].mxu0
  %v805 = vadd.f32 0.0, %v804
  %v806 = vpop.f32.mrb[0].mxu0
  %v807 = vadd.f32 0.0, %v806
  %808 = vdwg.mxu0
  %v809 = vand.u32 %v681, 4294901760
  %v810 = vsub.f32 %v681, %v809
  %v811 = vand.u32 %v810, 4294901760
  %v812 = vsub.f32 %v810, %v811
  %v813 = vand.u32 %v812, 4294901760
  %814 = vmatprep.subr.mxu0 %v813
  %v815 = vand.u32 %v680, 4294901760
  %v816 = vsub.f32 %v680, %v815
  %v817 = vand.u32 %v816, 4294901760
  %v818 = vsub.f32 %v816, %v817
  %v819 = vand.u32 %v818, 4294901760
  %820 = vmatpush1.msra.mxu0 %v819
  %v821 = vand.u32 %v683, 4294901760
  %v822 = vsub.f32 %v683, %v821
  %v823 = vand.u32 %v822, 4294901760
  %v824 = vsub.f32 %v822, %v823
  %v825 = vand.u32 %v824, 4294901760
  %826 = vmatprep.subr.mxu0 %v825
  %v827 = vand.u32 %v682, 4294901760
  %v828 = vsub.f32 %v682, %v827
  %v829 = vand.u32 %v828, 4294901760
  %v830 = vsub.f32 %v828, %v829
  %v831 = vand.u32 %v830, 4294901760
  %832 = vmatpush1.msra.mxu0 %v831
  %833 = vmatprep.subr.mxu0 0.0
  %834 = vmatpush1.msra.mxu0 0.0
  %835 = vmatprep.subr.mxu0 0.0
  %836 = vmatpush1.msra.mxu0 0.0
  %837 = vmatprep.subr.mxu0 0.0
  %838 = vmatpush1.msra.mxu0 0.0
  %839 = vmatprep.subr.mxu0 0.0
  %840 = vmatpush1.msra.mxu0 0.0
  %841 = vmatprep.subr.mxu0 0.0
  %842 = vmatpush1.msra.mxu0 0.0
  %843 = vmatprep.subr.mxu0 0.0
  %844 = vmatpush1.msra.mxu0 0.0
  %845 = vmatprep.subr.mxu0 0.0
  %846 = vmatpush1.msra.mxu0 0.0
  %847 = vmatprep.subr.mxu0 0.0
  %848 = vmatpush1.msra.mxu0 0.0
  %849 = vmatprep.subr.mxu0 0.0
  %850 = vmatpush1.msra.mxu0 0.0
  %851 = vmatprep.subr.mxu0 0.0
  %852 = vmatpush1.msra.mxu0 0.0
  %853 = vmatprep.subr.mxu0 0.0
  %854 = vmatpush1.msra.mxu0 0.0
  %855 = vmatprep.subr.mxu0 0.0
  %856 = vmatpush1.msra.mxu0 0.0
  %857 = vmatprep.subr.mxu0 0.0
  %858 = vmatpush1.msra.mxu0 0.0
  %859 = vmatprep.subr.mxu0 0.0
  %860 = vmatpush1.msra.mxu0 0.0
  %861 = vmatprep.subr.mxu0 0.0
  %862 = vmatpush1.msra.mxu0 0.0
  %863 = vmatprep.subr.mxu0 0.0
  %864 = vmatpush1.msra.mxu0 0.0
  %865 = vmatprep.subr.mxu0 0.0
  %866 = vmatpush1.msra.mxu0 0.0
  %867 = vmatprep.subr.mxu0 0.0
  %868 = vmatpush1.msra.mxu0 0.0
  %869 = vmatprep.subr.mxu0 0.0
  %870 = vmatpush1.msra.mxu0 0.0
  %871 = vmatprep.subr.mxu0 0.0
  %872 = vmatpush1.msra.mxu0 0.0
  %873 = vmatprep.subr.mxu0 0.0
  %874 = vmatpush1.msra.mxu0 0.0
  %875 = vmatprep.subr.mxu0 0.0
  %876 = vmatpush1.msra.mxu0 0.0
  %877 = vmatprep.subr.mxu0 0.0
  %878 = vmatpush1.msra.mxu0 0.0
  %879 = vmatprep.subr.mxu0 0.0
  %880 = vmatpush1.msra.mxu0 0.0
  %881 = vmatprep.subr.mxu0 0.0
  %882 = vmatpush1.msra.mxu0 0.0
  %883 = vmatprep.subr.mxu0 0.0
  %884 = vmatpush1.msra.mxu0 0.0
  %885 = vmatprep.subr.mxu0 0.0
  %886 = vmatpush1.msra.mxu0 0.0
  %887 = vmatprep.subr.mxu0 0.0
  %888 = vmatpush1.msra.mxu0 0.0
  %889 = vmatprep.subr.mxu0 0.0
  %890 = vmatpush1.msra.mxu0 0.0
  %891 = vmatprep.subr.mxu0 0.0
  %892 = vmatpush1.msra.mxu0 0.0
  %893 = vmatprep.mubr.f32.mxu0 0.0
  %v894 = vand.u32 %v685, 4294901760
  %895 = vmatmul.mubr.f32.gmra.mrb[0].mxu0 %v894
  %v896 = vpop.f32.mrb[0].mxu0
  %v897 = vadd.f32 %v772, %v896
  %v898 = vpop.f32.mrb[0].mxu0
  %v899 = vadd.f32 %v774, %v898
  %900 = vmatprep.mubr.f32.mxu0 0.0
  %v901 = vand.u32 %v688, 4294901760
  %902 = vmatmul.mubr.f32.gmra.mrb[0].mxu0 %v901
  %v903 = vpop.f32.mrb[0].mxu0
  %v904 = vadd.f32 %v783, %v903
  %v905 = vpop.f32.mrb[0].mxu0
  %v906 = vadd.f32 %v785, %v905
  %907 = vmatprep.mubr.f32.mxu0 0.0
  %v908 = vand.u32 %v691, 4294901760
  %909 = vmatmul.mubr.f32.gmra.mrb[0].mxu0 %v908
  %v910 = vpop.f32.mrb[0].mxu0
  %v911 = vadd.f32 %v794, %v910
  %v912 = vpop.f32.mrb[0].mxu0
  %v913 = vadd.f32 %v796, %v912
  %914 = vmatprep.mubr.f32.mxu0 0.0
  %v915 = vand.u32 %v694, 4294901760
  %916 = vmatmul.mubr.f32.gmra.mrb[0].mxu0 %v915
  %v917 = vpop.f32.mrb[0].mxu0
  %v918 = vadd.f32 %v805, %v917
  %v919 = vpop.f32.mrb[0].mxu0
  %v920 = vadd.f32 %v807, %v919
  %921 = vdwg.mxu0
  %v922 = vand.u32 %v681, 4294901760
  %v923 = vsub.f32 %v681, %v922
  %924 = vmatprep.subr.mxu0 %v923
  %v925 = vand.u32 %v680, 4294901760
  %v926 = vsub.f32 %v680, %v925
  %927 = vmatpush1.msra.mxu0 %v926
  %v928 = vand.u32 %v683, 4294901760
  %v929 = vsub.f32 %v683, %v928
  %930 = vmatprep.subr.mxu0 %v929
  %v931 = vand.u32 %v682, 4294901760
  %v932 = vsub.f32 %v682, %v931
  %933 = vmatpush1.msra.mxu0 %v932
  %934 = vmatprep.subr.mxu0 0.0
  %935 = vmatpush1.msra.mxu0 0.0
  %936 = vmatprep.subr.mxu0 0.0
  %937 = vmatpush1.msra.mxu0 0.0
  %938 = vmatprep.subr.mxu0 0.0
  %939 = vmatpush1.msra.mxu0 0.0
  %940 = vmatprep.subr.mxu0 0.0
  %941 = vmatpush1.msra.mxu0 0.0
  %942 = vmatprep.subr.mxu0 0.0
  %943 = vmatpush1.msra.mxu0 0.0
  %944 = vmatprep.subr.mxu0 0.0
  %945 = vmatpush1.msra.mxu0 0.0
  %946 = vmatprep.subr.mxu0 0.0
  %947 = vmatpush1.msra.mxu0 0.0
  %948 = vmatprep.subr.mxu0 0.0
  %949 = vmatpush1.msra.mxu0 0.0
  %950 = vmatprep.subr.mxu0 0.0
  %951 = vmatpush1.msra.mxu0 0.0
  %952 = vmatprep.subr.mxu0 0.0
  %953 = vmatpush1.msra.mxu0 0.0
  %954 = vmatprep.subr.mxu0 0.0
  %955 = vmatpush1.msra.mxu0 0.0
  %956 = vmatprep.subr.mxu0 0.0
  %957 = vmatpush1.msra.mxu0 0.0
  %958 = vmatprep.subr.mxu0 0.0
  %959 = vmatpush1.msra.mxu0 0.0
  %960 = vmatprep.subr.mxu0 0.0
  %961 = vmatpush1.msra.mxu0 0.0
  %962 = vmatprep.subr.mxu0 0.0
  %963 = vmatpush1.msra.mxu0 0.0
  %964 = vmatprep.subr.mxu0 0.0
  %965 = vmatpush1.msra.mxu0 0.0
  %966 = vmatprep.subr.mxu0 0.0
  %967 = vmatpush1.msra.mxu0 0.0
  %968 = vmatprep.subr.mxu0 0.0
  %969 = vmatpush1.msra.mxu0 0.0
  %970 = vmatprep.subr.mxu0 0.0
  %971 = vmatpush1.msra.mxu0 0.0
  %972 = vmatprep.subr.mxu0 0.0
  %973 = vmatpush1.msra.mxu0 0.0
  %974 = vmatprep.subr.mxu0 0.0
  %975 = vmatpush1.msra.mxu0 0.0
  %976 = vmatprep.subr.mxu0 0.0
  %977 = vmatpush1.msra.mxu0 0.0
  %978 = vmatprep.subr.mxu0 0.0
  %979 = vmatpush1.msra.mxu0 0.0
  %980 = vmatprep.subr.mxu0 0.0
  %981 = vmatpush1.msra.mxu0 0.0
  %982 = vmatprep.subr.mxu0 0.0
  %983 = vmatpush1.msra.mxu0 0.0
  %984 = vmatprep.subr.mxu0 0.0
  %985 = vmatpush1.msra.mxu0 0.0
  %986 = vmatprep.subr.mxu0 0.0
  %987 = vmatpush1.msra.mxu0 0.0
  %988 = vmatprep.subr.mxu0 0.0
  %989 = vmatpush1.msra.mxu0 0.0
  %990 = vmatprep.subr.mxu0 0.0
  %991 = vmatpush1.msra.mxu0 0.0
  %992 = vmatprep.subr.mxu0 0.0
  %993 = vmatpush1.msra.mxu0 0.0
  %994 = vmatprep.mubr.f32.mxu0 0.0
  %v995 = vand.u32 %v685, 4294901760
  %v996 = vsub.f32 %v685, %v995
  %997 = vmatmul.mubr.f32.gmra.mrb[0].mxu0 %v996
  %v998 = vpop.f32.mrb[0].mxu0
  %v999 = vadd.f32 %v897, %v998
  %v1000 = vpop.f32.mrb[0].mxu0
  %v1001 = vadd.f32 %v899, %v1000
  %1002 = vmatprep.mubr.f32.mxu0 0.0
  %v1003 = vand.u32 %v688, 4294901760
  %v1004 = vsub.f32 %v688, %v1003
  %1005 = vmatmul.mubr.f32.gmra.mrb[0].mxu0 %v1004
  %v1006 = vpop.f32.mrb[0].mxu0
  %v1007 = vadd.f32 %v904, %v1006
  %v1008 = vpop.f32.mrb[0].mxu0
  %v1009 = vadd.f32 %v906, %v1008
  %1010 = vmatprep.mubr.f32.mxu0 0.0
  %v1011 = vand.u32 %v691, 4294901760
  %v1012 = vsub.f32 %v691, %v1011
  %1013 = vmatmul.mubr.f32.gmra.mrb[0].mxu0 %v1012
  %v1014 = vpop.f32.mrb[0].mxu0
  %v1015 = vadd.f32 %v911, %v1014
  %v1016 = vpop.f32.mrb[0].mxu0
  %v1017 = vadd.f32 %v913, %v1016
  %1018 = vmatprep.mubr.f32.mxu0 0.0
  %v1019 = vand.u32 %v694, 4294901760
  %v1020 = vsub.f32 %v694, %v1019
  %1021 = vmatmul.mubr.f32.gmra.mrb[0].mxu0 %v1020
  %v1022 = vpop.f32.mrb[0].mxu0
  %v1023 = vadd.f32 %v918, %v1022
  %v1024 = vpop.f32.mrb[0].mxu0
  %v1025 = vadd.f32 %v920, %v1024
  %1026 = vdwg.mxu0
  %v1027 = vand.u32 %v681, 4294901760
  %1028 = vmatprep.subr.mxu0 %v1027
  %v1029 = vand.u32 %v680, 4294901760
  %1030 = vmatpush1.msra.mxu0 %v1029
  %v1031 = vand.u32 %v683, 4294901760
  %1032 = vmatprep.subr.mxu0 %v1031
  %v1033 = vand.u32 %v682, 4294901760
  %1034 = vmatpush1.msra.mxu0 %v1033
  %1035 = vmatprep.subr.mxu0 0.0
  %1036 = vmatpush1.msra.mxu0 0.0
  %1037 = vmatprep.subr.mxu0 0.0
  %1038 = vmatpush1.msra.mxu0 0.0
  %1039 = vmatprep.subr.mxu0 0.0
  %1040 = vmatpush1.msra.mxu0 0.0
  %1041 = vmatprep.subr.mxu0 0.0
  %1042 = vmatpush1.msra.mxu0 0.0
  %1043 = vmatprep.subr.mxu0 0.0
  %1044 = vmatpush1.msra.mxu0 0.0
  %1045 = vmatprep.subr.mxu0 0.0
  %1046 = vmatpush1.msra.mxu0 0.0
  %1047 = vmatprep.subr.mxu0 0.0
  %1048 = vmatpush1.msra.mxu0 0.0
  %1049 = vmatprep.subr.mxu0 0.0
  %1050 = vmatpush1.msra.mxu0 0.0
  %1051 = vmatprep.subr.mxu0 0.0
  %1052 = vmatpush1.msra.mxu0 0.0
  %1053 = vmatprep.subr.mxu0 0.0
  %1054 = vmatpush1.msra.mxu0 0.0
  %1055 = vmatprep.subr.mxu0 0.0
  %1056 = vmatpush1.msra.mxu0 0.0
  %1057 = vmatprep.subr.mxu0 0.0
  %1058 = vmatpush1.msra.mxu0 0.0
  %1059 = vmatprep.subr.mxu0 0.0
  %1060 = vmatpush1.msra.mxu0 0.0
  %1061 = vmatprep.subr.mxu0 0.0
  %1062 = vmatpush1.msra.mxu0 0.0
  %1063 = vmatprep.subr.mxu0 0.0
  %1064 = vmatpush1.msra.mxu0 0.0
  %1065 = vmatprep.subr.mxu0 0.0
  %1066 = vmatpush1.msra.mxu0 0.0
  %1067 = vmatprep.subr.mxu0 0.0
  %1068 = vmatpush1.msra.mxu0 0.0
  %1069 = vmatprep.subr.mxu0 0.0
  %1070 = vmatpush1.msra.mxu0 0.0
  %1071 = vmatprep.subr.mxu0 0.0
  %1072 = vmatpush1.msra.mxu0 0.0
  %1073 = vmatprep.subr.mxu0 0.0
  %1074 = vmatpush1.msra.mxu0 0.0
  %1075 = vmatprep.subr.mxu0 0.0
  %1076 = vmatpush1.msra.mxu0 0.0
  %1077 = vmatprep.subr.mxu0 0.0
  %1078 = vmatpush1.msra.mxu0 0.0
  %1079 = vmatprep.subr.mxu0 0.0
  %1080 = vmatpush1.msra.mxu0 0.0
  %1081 = vmatprep.subr.mxu0 0.0
  %1082 = vmatpush1.msra.mxu0 0.0
  %1083 = vmatprep.subr.mxu0 0.0
  %1084 = vmatpush1.msra.mxu0 0.0
  %1085 = vmatprep.subr.mxu0 0.0
  %1086 = vmatpush1.msra.mxu0 0.0
  %1087 = vmatprep.subr.mxu0 0.0
  %1088 = vmatpush1.msra.mxu0 0.0
  %1089 = vmatprep.subr.mxu0 0.0
  %1090 = vmatpush1.msra.mxu0 0.0
  %1091 = vmatprep.subr.mxu0 0.0
  %1092 = vmatpush1.msra.mxu0 0.0
  %1093 = vmatprep.subr.mxu0 0.0
  %1094 = vmatpush1.msra.mxu0 0.0
  %1095 = vmatprep.mubr.f32.mxu0 0.0
  %v1096 = vand.u32 %v685, 4294901760
  %v1097 = vsub.f32 %v685, %v1096
  %v1098 = vand.u32 %v1097, 4294901760
  %1099 = vmatmul.mubr.f32.gmra.mrb[0].mxu0 %v1098
  %v1100 = vpop.f32.mrb[0].mxu0
  %v1101 = vadd.f32 %v999, %v1100
  %v1102 = vpop.f32.mrb[0].mxu0
  %v1103 = vadd.f32 %v1001, %v1102
  %1104 = vmatprep.mubr.f32.mxu0 0.0
  %v1105 = vand.u32 %v688, 4294901760
  %v1106 = vsub.f32 %v688, %v1105
  %v1107 = vand.u32 %v1106, 4294901760
  %1108 = vmatmul.mubr.f32.gmra.mrb[0].mxu0 %v1107
  %v1109 = vpop.f32.mrb[0].mxu0
  %v1110 = vadd.f32 %v1007, %v1109
  %v1111 = vpop.f32.mrb[0].mxu0
  %v1112 = vadd.f32 %v1009, %v1111
  %1113 = vmatprep.mubr.f32.mxu0 0.0
  %v1114 = vand.u32 %v691, 4294901760
  %v1115 = vsub.f32 %v691, %v1114
  %v1116 = vand.u32 %v1115, 4294901760
  %1117 = vmatmul.mubr.f32.gmra.mrb[0].mxu0 %v1116
  %v1118 = vpop.f32.mrb[0].mxu0
  %v1119 = vadd.f32 %v1015, %v1118
  %v1120 = vpop.f32.mrb[0].mxu0
  %v1121 = vadd.f32 %v1017, %v1120
  %1122 = vmatprep.mubr.f32.mxu0 0.0
  %v1123 = vand.u32 %v694, 4294901760
  %v1124 = vsub.f32 %v694, %v1123
  %v1125 = vand.u32 %v1124, 4294901760
  %1126 = vmatmul.mubr.f32.gmra.mrb[0].mxu0 %v1125
  %v1127 = vpop.f32.mrb[0].mxu0
  %v1128 = vadd.f32 %v1023, %v1127
  %v1129 = vpop.f32.mrb[0].mxu0
  %v1130 = vadd.f32 %v1025, %v1129
  %1131 = vdwg.mxu0
  %v1132 = vand.u32 %v681, 4294901760
  %v1133 = vsub.f32 %v681, %v1132
  %v1134 = vand.u32 %v1133, 4294901760
  %1135 = vmatprep.subr.mxu0 %v1134
  %v1136 = vand.u32 %v680, 4294901760
  %v1137 = vsub.f32 %v680, %v1136
  %v1138 = vand.u32 %v1137, 4294901760
  %1139 = vmatpush1.msra.mxu0 %v1138
  %v1140 = vand.u32 %v683, 4294901760
  %v1141 = vsub.f32 %v683, %v1140
  %v1142 = vand.u32 %v1141, 4294901760
  %1143 = vmatprep.subr.mxu0 %v1142
  %v1144 = vand.u32 %v682, 4294901760
  %v1145 = vsub.f32 %v682, %v1144
  %v1146 = vand.u32 %v1145, 4294901760
  %1147 = vmatpush1.msra.mxu0 %v1146
  %1148 = vmatprep.subr.mxu0 0.0
  %1149 = vmatpush1.msra.mxu0 0.0
  %1150 = vmatprep.subr.mxu0 0.0
  %1151 = vmatpush1.msra.mxu0 0.0
  %1152 = vmatprep.subr.mxu0 0.0
  %1153 = vmatpush1.msra.mxu0 0.0
  %1154 = vmatprep.subr.mxu0 0.0
  %1155 = vmatpush1.msra.mxu0 0.0
  %1156 = vmatprep.subr.mxu0 0.0
  %1157 = vmatpush1.msra.mxu0 0.0
  %1158 = vmatprep.subr.mxu0 0.0
  %1159 = vmatpush1.msra.mxu0 0.0
  %1160 = vmatprep.subr.mxu0 0.0
  %1161 = vmatpush1.msra.mxu0 0.0
  %1162 = vmatprep.subr.mxu0 0.0
  %1163 = vmatpush1.msra.mxu0 0.0
  %1164 = vmatprep.subr.mxu0 0.0
  %1165 = vmatpush1.msra.mxu0 0.0
  %1166 = vmatprep.subr.mxu0 0.0
  %1167 = vmatpush1.msra.mxu0 0.0
  %1168 = vmatprep.subr.mxu0 0.0
  %1169 = vmatpush1.msra.mxu0 0.0
  %1170 = vmatprep.subr.mxu0 0.0
  %1171 = vmatpush1.msra.mxu0 0.0
  %1172 = vmatprep.subr.mxu0 0.0
  %1173 = vmatpush1.msra.mxu0 0.0
  %1174 = vmatprep.subr.mxu0 0.0
  %1175 = vmatpush1.msra.mxu0 0.0
  %1176 = vmatprep.subr.mxu0 0.0
  %1177 = vmatpush1.msra.mxu0 0.0
  %1178 = vmatprep.subr.mxu0 0.0
  %1179 = vmatpush1.msra.mxu0 0.0
  %1180 = vmatprep.subr.mxu0 0.0
  %1181 = vmatpush1.msra.mxu0 0.0
  %1182 = vmatprep.subr.mxu0 0.0
  %1183 = vmatpush1.msra.mxu0 0.0
  %1184 = vmatprep.subr.mxu0 0.0
  %1185 = vmatpush1.msra.mxu0 0.0
  %1186 = vmatprep.subr.mxu0 0.0
  %1187 = vmatpush1.msra.mxu0 0.0
  %1188 = vmatprep.subr.mxu0 0.0
  %1189 = vmatpush1.msra.mxu0 0.0
  %1190 = vmatprep.subr.mxu0 0.0
  %1191 = vmatpush1.msra.mxu0 0.0
  %1192 = vmatprep.subr.mxu0 0.0
  %1193 = vmatpush1.msra.mxu0 0.0
  %1194 = vmatprep.subr.mxu0 0.0
  %1195 = vmatpush1.msra.mxu0 0.0
  %1196 = vmatprep.subr.mxu0 0.0
  %1197 = vmatpush1.msra.mxu0 0.0
  %1198 = vmatprep.subr.mxu0 0.0
  %1199 = vmatpush1.msra.mxu0 0.0
  %1200 = vmatprep.subr.mxu0 0.0
  %1201 = vmatpush1.msra.mxu0 0.0
  %1202 = vmatprep.subr.mxu0 0.0
  %1203 = vmatpush1.msra.mxu0 0.0
  %1204 = vmatprep.subr.mxu0 0.0
  %1205 = vmatpush1.msra.mxu0 0.0
  %1206 = vmatprep.subr.mxu0 0.0
  %1207 = vmatpush1.msra.mxu0 0.0
  %1208 = vmatprep.mubr.f32.mxu0 0.0
  %v1209 = vand.u32 %v685, 4294901760
  %1210 = vmatmul.mubr.f32.gmra.mrb[0].mxu0 %v1209
  %v1211 = vpop.f32.mrb[0].mxu0
  %v1212 = vadd.f32 %v1101, %v1211
  %v1213 = vpop.f32.mrb[0].mxu0
  %v1214 = vadd.f32 %v1103, %v1213
  %1215 = vmatprep.mubr.f32.mxu0 0.0
  %v1216 = vand.u32 %v688, 4294901760
  %1217 = vmatmul.mubr.f32.gmra.mrb[0].mxu0 %v1216
  %v1218 = vpop.f32.mrb[0].mxu0
  %v1219 = vadd.f32 %v1110, %v1218
  %v1220 = vpop.f32.mrb[0].mxu0
  %v1221 = vadd.f32 %v1112, %v1220
  %1222 = vmatprep.mubr.f32.mxu0 0.0
  %v1223 = vand.u32 %v691, 4294901760
  %1224 = vmatmul.mubr.f32.gmra.mrb[0].mxu0 %v1223
  %v1225 = vpop.f32.mrb[0].mxu0
  %v1226 = vadd.f32 %v1119, %v1225
  %v1227 = vpop.f32.mrb[0].mxu0
  %v1228 = vadd.f32 %v1121, %v1227
  %1229 = vmatprep.mubr.f32.mxu0 0.0
  %v1230 = vand.u32 %v694, 4294901760
  %1231 = vmatmul.mubr.f32.gmra.mrb[0].mxu0 %v1230
  %v1232 = vpop.f32.mrb[0].mxu0
  %v1233 = vadd.f32 %v1128, %v1232
  %v1234 = vpop.f32.mrb[0].mxu0
  %v1235 = vadd.f32 %v1130, %v1234
  %1236 = vdwg.mxu0
  %v1237 = vand.u32 %v681, 4294901760
  %1238 = vmatprep.subr.mxu0 %v1237
  %v1239 = vand.u32 %v680, 4294901760
  %1240 = vmatpush1.msra.mxu0 %v1239
  %v1241 = vand.u32 %v683, 4294901760
  %1242 = vmatprep.subr.mxu0 %v1241
  %v1243 = vand.u32 %v682, 4294901760
  %1244 = vmatpush1.msra.mxu0 %v1243
  %1245 = vmatprep.subr.mxu0 0.0
  %1246 = vmatpush1.msra.mxu0 0.0
  %1247 = vmatprep.subr.mxu0 0.0
  %1248 = vmatpush1.msra.mxu0 0.0
  %1249 = vmatprep.subr.mxu0 0.0
  %1250 = vmatpush1.msra.mxu0 0.0
  %1251 = vmatprep.subr.mxu0 0.0
  %1252 = vmatpush1.msra.mxu0 0.0
  %1253 = vmatprep.subr.mxu0 0.0
  %1254 = vmatpush1.msra.mxu0 0.0
  %1255 = vmatprep.subr.mxu0 0.0
  %1256 = vmatpush1.msra.mxu0 0.0
  %1257 = vmatprep.subr.mxu0 0.0
  %1258 = vmatpush1.msra.mxu0 0.0
  %1259 = vmatprep.subr.mxu0 0.0
  %1260 = vmatpush1.msra.mxu0 0.0
  %1261 = vmatprep.subr.mxu0 0.0
  %1262 = vmatpush1.msra.mxu0 0.0
  %1263 = vmatprep.subr.mxu0 0.0
  %1264 = vmatpush1.msra.mxu0 0.0
  %1265 = vmatprep.subr.mxu0 0.0
  %1266 = vmatpush1.msra.mxu0 0.0
  %1267 = vmatprep.subr.mxu0 0.0
  %1268 = vmatpush1.msra.mxu0 0.0
  %1269 = vmatprep.subr.mxu0 0.0
  %1270 = vmatpush1.msra.mxu0 0.0
  %1271 = vmatprep.subr.mxu0 0.0
  %1272 = vmatpush1.msra.mxu0 0.0
  %1273 = vmatprep.subr.mxu0 0.0
  %1274 = vmatpush1.msra.mxu0 0.0
  %1275 = vmatprep.subr.mxu0 0.0
  %1276 = vmatpush1.msra.mxu0 0.0
  %1277 = vmatprep.subr.mxu0 0.0
  %1278 = vmatpush1.msra.mxu0 0.0
  %1279 = vmatprep.subr.mxu0 0.0
  %1280 = vmatpush1.msra.mxu0 0.0
  %1281 = vmatprep.subr.mxu0 0.0
  %1282 = vmatpush1.msra.mxu0 0.0
  %1283 = vmatprep.subr.mxu0 0.0
  %1284 = vmatpush1.msra.mxu0 0.0
  %1285 = vmatprep.subr.mxu0 0.0
  %1286 = vmatpush1.msra.mxu0 0.0
  %1287 = vmatprep.subr.mxu0 0.0
  %1288 = vmatpush1.msra.mxu0 0.0
  %1289 = vmatprep.subr.mxu0 0.0
  %1290 = vmatpush1.msra.mxu0 0.0
  %1291 = vmatprep.subr.mxu0 0.0
  %1292 = vmatpush1.msra.mxu0 0.0
  %1293 = vmatprep.subr.mxu0 0.0
  %1294 = vmatpush1.msra.mxu0 0.0
  %1295 = vmatprep.subr.mxu0 0.0
  %1296 = vmatpush1.msra.mxu0 0.0
  %1297 = vmatprep.subr.mxu0 0.0
  %1298 = vmatpush1.msra.mxu0 0.0
  %1299 = vmatprep.subr.mxu0 0.0
  %1300 = vmatpush1.msra.mxu0 0.0
  %1301 = vmatprep.subr.mxu0 0.0
  %1302 = vmatpush1.msra.mxu0 0.0
  %1303 = vmatprep.subr.mxu0 0.0
  %1304 = vmatpush1.msra.mxu0 0.0
  %1305 = vmatprep.mubr.f32.mxu0 0.0
  %v1306 = vand.u32 %v685, 4294901760
  %1307 = vmatmul.mubr.f32.gmra.mrb[0].mxu0 %v1306
  %v1308 = vpop.f32.mrb[0].mxu0
  %v1309 = vadd.f32 %v1212, %v1308
  %v1310 = vpop.f32.mrb[0].mxu0
  %v1311 = vadd.f32 %v1214, %v1310
  %1312 = vmatprep.mubr.f32.mxu0 0.0
  %v1313 = vand.u32 %v688, 4294901760
  %1314 = vmatmul.mubr.f32.gmra.mrb[0].mxu0 %v1313
  %v1315 = vpop.f32.mrb[0].mxu0
  %v1316 = vadd.f32 %v1219, %v1315
  %v1317 = vpop.f32.mrb[0].mxu0
  %v1318 = vadd.f32 %v1221, %v1317
  %1319 = vmatprep.mubr.f32.mxu0 0.0
  %v1320 = vand.u32 %v691, 4294901760
  %1321 = vmatmul.mubr.f32.gmra.mrb[0].mxu0 %v1320
  %v1322 = vpop.f32.mrb[0].mxu0
  %v1323 = vadd.f32 %v1226, %v1322
  %v1324 = vpop.f32.mrb[0].mxu0
  %v1325 = vadd.f32 %v1228, %v1324
  %1326 = vmatprep.mubr.f32.mxu0 0.0
  %v1327 = vand.u32 %v694, 4294901760
  %1328 = vmatmul.mubr.f32.gmra.mrb[0].mxu0 %v1327
  %v1329 = vpop.f32.mrb[0].mxu0
  %v1330 = vadd.f32 %v1233, %v1329
  %v1331 = vpop.f32.mrb[0].mxu0
  %v1332 = vadd.f32 %v1235, %v1331
  %1333 = vdwg.mxu0
  %1334 = vst [vmem:[%s4] sm:$0xff] %v651
  %1335 = vst [vmem:[%s4 + $0x8] sm:$0xff] %v653
  %1336 = vst [vmem:[%s4 + $0x10] sm:$0xff] %v658
  %1337 = vst [vmem:[%s4 + $0x18] sm:$0xff] %v660
  %1338 = vst [vmem:[%s4 + $0x20] sm:$0xff] %v665
  %1339 = vst [vmem:[%s4 + $0x28] sm:$0xff] %v667
  %1340 = vst [vmem:[%s4 + $0x30] sm:$0xff] %v672
  %1341 = vst [vmem:[%s4 + $0x38] sm:$0xff] %v674
  %1342 = vst [vmem:[%s4 + $0x40] sm:$0xff] %v1309
  %1343 = vst [vmem:[%s4 + $0x48] sm:$0xff] %v1311
  %1344 = vst [vmem:[%s4 + $0x50] sm:$0xff] %v1316
  %1345 = vst [vmem:[%s4 + $0x58] sm:$0xff] %v1318
  %1346 = vst [vmem:[%s4 + $0x60] sm:$0xff] %v1323
  %1347 = vst [vmem:[%s4 + $0x68] sm:$0xff] %v1325
  %1348 = vst [vmem:[%s4 + $0x70] sm:$0xff] %v1330
  %1349 = vst [vmem:[%s4 + $0x78] sm:$0xff] %v1332
  %s1350 = scalar_lea.vmem %s4, 128
  %1351 = vst [vmem:[%s1350] sm:$0xff] %v651
  %1352 = vst [vmem:[%s1350 + $0x8] sm:$0xff] %v653
  %1353 = vst [vmem:[%s1350 + $0x10] sm:$0xff] %v658
  %1354 = vst [vmem:[%s1350 + $0x18] sm:$0xff] %v660
  %1355 = vst [vmem:[%s1350 + $0x20] sm:$0xff] %v665
  %1356 = vst [vmem:[%s1350 + $0x28] sm:$0xff] %v667
  %1357 = vst [vmem:[%s1350 + $0x30] sm:$0xff] %v672
  %1358 = vst [vmem:[%s1350 + $0x38] sm:$0xff] %v674
  %1359 = vst [vmem:[%s1350 + $0x40] sm:$0xff] %v1309
  %1360 = vst [vmem:[%s1350 + $0x48] sm:$0xff] %v1311
  %1361 = vst [vmem:[%s1350 + $0x50] sm:$0xff] %v1316
  %1362 = vst [vmem:[%s1350 + $0x58] sm:$0xff] %v1318
  %1363 = vst [vmem:[%s1350 + $0x60] sm:$0xff] %v1323
  %1364 = vst [vmem:[%s1350 + $0x68] sm:$0xff] %v1325
  %1365 = vst [vmem:[%s1350 + $0x70] sm:$0xff] %v1330
  %1366 = vst [vmem:[%s1350 + $0x78] sm:$0xff] %v1332
  // Predicated region
  $region18: #{position_embedding_learned.1} parent=0 // pred_check
    _
  $region19: #{position_embedding_learned.1} parent=0 // pred_check_branch
    %1368 = sbr.rel (0) target = $region21
  $region20: #{position_embedding_learned.1} parent=0 // pred_region
    _
  $region21: #{position_embedding_learned.1} parent=0 // pred_fallthru
    _
  // Predicated region
  $region22: #{position_embedding_learned.1} parent=0 // pred_check
    _
  $region23: #{position_embedding_learned.1} parent=0 // pred_check_branch
    %1370 = sbr.rel (0) target = $region25
  $region24: #{position_embedding_learned.1} parent=0 // pred_region
    _
  $region25: #{position_embedding_learned.1} parent=0 // pred_fallthru
    _

</llo_original>
